<compile_context>
chip_gen: v7x
topology: tpu7x:2x2x1
jax: 0.10.0
libtpu: 0.0.40
codegen_flags: <defaults>
</compile_context>

<pallas_src>
import functools

import jax
import jax.numpy as jnp
from jax.experimental import pallas as pl
from jax.experimental.pallas import tpu as pltpu

EPS = 1e-5


def _round_up(v, m):
    return ((v + m - 1) // m) * m


def _sublane_multiple(dtype):
    # Native packed tiles: (8,128) f32, (16,128) bf16, (32,128) int8/fp8.
    return max(8, 32 // jnp.dtype(dtype).itemsize)


# --------------------- fused single-pass kernel (x fits in VMEM) -------------
def _gra_fused_kernel(wx_ref, bx_ref, wy_ref, by_ref, x_ref, o_ref):
    b, d = x_ref.shape
    x = x_ref[...].astype(jnp.float32)
    inv_b = jnp.float32(1.0 / b)
    inv_d = jnp.float32(1.0 / d)

    row_mean = jnp.sum(x, axis=1, keepdims=True) * inv_d        # (B, 1)
    col_mean = jnp.sum(x, axis=0, keepdims=True) * inv_b        # (1, D)

    rx = wx_ref[0] * row_mean + bx_ref[0]
    ry = wy_ref[0] * col_mean + by_ref[0]

    # Myln over the length-B row statistics.
    mean_r = jnp.sum(rx, axis=0, keepdims=True) * inv_b
    dr = rx - mean_r
    var_r = jnp.sum(dr * dr, axis=0, keepdims=True) * inv_b
    rgate = jax.nn.sigmoid(dr / (jnp.sqrt(var_r + EPS) + EPS))   # (B, 1)

    # Myln over the length-D column statistics.
    mean_c = jnp.sum(ry, axis=1, keepdims=True) * inv_d
    dc = ry - mean_c
    var_c = jnp.sum(dc * dc, axis=1, keepdims=True) * inv_d
    cgate = jax.nn.sigmoid(dc / (jnp.sqrt(var_c + EPS) + EPS))   # (1, D)

    o_ref[...] = (x * rgate * cgate).astype(o_ref.dtype)


# ----------------------------- pass 1: stats + gates -------------------------
def _stats_gate_kernel(wx_ref, bx_ref, wy_ref, by_ref, x_ref, xs_ref, ys_ref,
                       *, true_b, true_d, mask_rows, mask_cols):
    i = pl.program_id(0)
    j = pl.program_id(1)
    nm = pl.num_programs(0)
    nn = pl.num_programs(1)
    bm, bn = x_ref.shape

    # Zero the VMEM-resident gate outputs (they double as accumulators).
    @pl.when((i == 0) & (j == 0))
    def _init():
        xs_ref[...] = jnp.zeros_like(xs_ref)
        ys_ref[...] = jnp.zeros_like(ys_ref)

    x = x_ref[...].astype(jnp.float32)

    # Ragged edge tiles: out-of-bounds lanes/sublanes hold unspecified data;
    # zero them before reducing.  Only emitted for statically-ragged dims, so
    # aligned shapes pay nothing.
    if mask_rows or mask_cols:
        valid = None
        if mask_rows:
            r = jax.lax.broadcasted_iota(jnp.int32, x.shape, 0) + i * bm
            valid = r < true_b
        if mask_cols:
            c = jax.lax.broadcasted_iota(jnp.int32, x.shape, 1) + j * bn
            vc = c < true_d
            valid = vc if valid is None else jnp.logical_and(valid, vc)
        x = jnp.where(valid, x, 0.0)

    # Per-tile partial sums (exact f32), stored lane-dense and accumulated
    # directly into the resident outputs.
    row_part = jnp.transpose(jnp.sum(x, axis=1, keepdims=True), (1, 0))  # (1, bm)
    col_part = jnp.sum(x, axis=0, keepdims=True)                         # (1, bn)
    xs_ref[i] = xs_ref[i] + row_part
    ys_ref[j] = ys_ref[j] + col_part

    # Last grid step: tiny O(B + D) affine + Myln + sigmoid, finalized in place.
    @pl.when((i == nm - 1) & (j == nn - 1))
    def _finalize():
        inv_b = jnp.float32(1.0 / true_b)
        inv_d = jnp.float32(1.0 / true_d)

        row_sum = xs_ref[...]                         # (nm, 1, bm)
        col_sum = ys_ref[...]                         # (nn, 1, bn)

        # Conv1d(1,1,1): scalar affine on the pooled means.
        rx = wx_ref[0] * (row_sum * inv_d) + bx_ref[0]
        ry = wy_ref[0] * (col_sum * inv_b) + by_ref[0]

        # Masks excluding the padded tail entries from the Myln statistics.
        r_idx = (jax.lax.broadcasted_iota(jnp.int32, rx.shape, 0) * bm
                 + jax.lax.broadcasted_iota(jnp.int32, rx.shape, 2))
        c_idx = (jax.lax.broadcasted_iota(jnp.int32, ry.shape, 0) * bn
                 + jax.lax.broadcasted_iota(jnp.int32, ry.shape, 2))
        r_ok = r_idx < true_b
        c_ok = c_idx < true_d

        mean_r = jnp.sum(jnp.where(r_ok, rx, 0.0), keepdims=True) * inv_b
        dr = jnp.where(r_ok, rx - mean_r, 0.0)
        var_r = jnp.sum(dr * dr, keepdims=True) * inv_b
        xs_ref[...] = jax.nn.sigmoid(
            (rx - mean_r) / (jnp.sqrt(var_r + EPS) + EPS))

        mean_c = jnp.sum(jnp.where(c_ok, ry, 0.0), keepdims=True) * inv_d
        dc = jnp.where(c_ok, ry - mean_c, 0.0)
        var_c = jnp.sum(dc * dc, keepdims=True) * inv_d
        ys_ref[...] = jax.nn.sigmoid(
            (ry - mean_c) / (jnp.sqrt(var_c + EPS) + EPS))


# ----------------------------- pass 2: apply gates ---------------------------
def _apply_kernel(xs_ref, ys_ref, x_ref, o_ref):
    rgate = jnp.transpose(xs_ref[0], (1, 0))      # (1, bm) -> (bm, 1), tiny XLU
    cgate = ys_ref[0]                             # (1, bn)
    o_ref[...] = (x_ref[...] * rgate * cgate).astype(o_ref.dtype)


# ----------------------------- wrapper ---------------------------------------
def gra_forward(x, wx, bx, wy, by, *, tile_m=1024, tile_n=1024,
                fused_bytes_limit=8 * 1024 * 1024):
    """x: (B, D). wx/bx/wy/by: shape-(1,) float32 Conv1d(1,1,1) params."""
    B, D = x.shape
    sub = _sublane_multiple(x.dtype)
    itemsize = jnp.dtype(x.dtype).itemsize
    f32 = jnp.float32
    smem = pl.BlockSpec(memory_space=pltpu.MemorySpace.SMEM)
    vmem_limit = 48 * 1024 * 1024            # explicit; fits v7x 64 MiB VMEM

    padded_bytes = _round_up(B, sub) * _round_up(D, 128) * itemsize

    # ---- fast path: keep x resident, single pass (2*B*D HBM traffic) -------
    if padded_bytes <= fused_bytes_limit:
        return pl.pallas_call(
            _gra_fused_kernel,
            grid=(1,),
            in_specs=[smem, smem, smem, smem,
                      pl.BlockSpec((B, D), lambda i: (0, 0))],
            out_specs=pl.BlockSpec((B, D), lambda i: (0, 0)),
            out_shape=jax.ShapeDtypeStruct((B, D), x.dtype),
            compiler_params=pltpu.CompilerParams(
                dimension_semantics=("arbitrary",),
                vmem_limit_bytes=vmem_limit),
        )(wx, bx, wy, by, x)

    # ---- general two-pass path ---------------------------------------------
    bm = min(_round_up(B, sub), _round_up(tile_m, sub))
    bn = min(_round_up(D, 128), _round_up(tile_n, 128))
    nm = pl.cdiv(B, bm)
    nn = pl.cdiv(D, bn)
    mask_rows = (B % bm) != 0
    mask_cols = (D % bn) != 0

    # pass 1: global row/col sums -> sigmoid gate vectors (sequential grid).
    xs, ys = pl.pallas_call(
        functools.partial(_stats_gate_kernel, true_b=B, true_d=D,
                          mask_rows=mask_rows, mask_cols=mask_cols),
        grid=(nm, nn),
        in_specs=[smem, smem, smem, smem,
                  pl.BlockSpec((bm, bn), lambda i, j: (i, j))],
        out_specs=(pl.BlockSpec((nm, 1, bm), lambda i, j: (0, 0, 0)),
                   pl.BlockSpec((nn, 1, bn), lambda i, j: (0, 0, 0))),
        out_shape=(jax.ShapeDtypeStruct((nm, 1, bm), f32),
                   jax.ShapeDtypeStruct((nn, 1, bn), f32)),
        compiler_params=pltpu.CompilerParams(
            dimension_semantics=("arbitrary", "arbitrary"),
            vmem_limit_bytes=vmem_limit),
    )(wx, bx, wy, by, x)

    # pass 2: tiled, lane-dense elementwise apply (parallel grid, both TCs).
    return pl.pallas_call(
        _apply_kernel,
        grid=(nm, nn),
        in_specs=[pl.BlockSpec((1, 1, bm), lambda i, j: (i, 0, 0)),
                  pl.BlockSpec((1, 1, bn), lambda i, j: (j, 0, 0)),
                  pl.BlockSpec((bm, bn), lambda i, j: (i, j))],
        out_specs=pl.BlockSpec((bm, bn), lambda i, j: (i, j)),
        out_shape=jax.ShapeDtypeStruct((B, D), x.dtype),
        compiler_params=pltpu.CompilerParams(
            dimension_semantics=("parallel", "parallel"),
            vmem_limit_bytes=vmem_limit),
    )(xs, ys, x)


# ----------------------------- pure-JAX reference ----------------------------
def _gra_reference(x, wx, bx, wy, by):
    B, D = x.shape
    row_mean = jnp.mean(x, axis=1, keepdims=True)
    col_mean = jnp.mean(x, axis=0, keepdims=True)
    rx = wx[0] * row_mean + bx[0]
    ry = wy[0] * col_mean + by[0]

    def myln(v, axis, n):
        m = jnp.sum(v, axis=axis, keepdims=True) / n
        var = jnp.sum((v - m) ** 2, axis=axis, keepdims=True) / n
        std = jnp.sqrt(var + EPS)
        return (v - m) / (std + EPS)

    rnorm = myln(rx, 0, B)
    cnorm = myln(ry, 1, D)
    return x * jax.nn.sigmoid(rnorm) * jax.nn.sigmoid(cnorm)


if __name__ == "__main__":
    key = jax.random.PRNGKey(0)
    kx, kp, kx2 = jax.random.split(key, 3)

    # Primary shape implied by the module: (batch_size, input_dim).
    B, D = 8, 32
    x = jax.random.normal(kx, (B, D), dtype=jnp.float32)

    # Conv1d(1, 1, kernel_size=1) parameters: one scalar weight + bias each.
    p = jax.random.normal(kp, (4,), dtype=jnp.float32) * 0.5
    wx, bx, wy, by = p[0:1], p[1:2], p[2:3], p[3:4]

    out = jax.block_until_ready(gra_forward(x, wx, bx, wy, by))
    ref = _gra_reference(x, wx, bx, wy, by)
    assert out.shape == (B, D)
    assert jnp.allclose(out, ref, atol=1e-5, rtol=1e-5), "mismatch (fused path)"

    # Unaligned shape + tiny tiles: exercises the two-pass path, in-kernel
    # ragged-edge masking, multi-tile accumulation and the parallel apply.
    B2, D2 = 13, 200
    x2 = jax.random.normal(kx2, (B2, D2), dtype=jnp.float32)
    out2 = jax.block_until_ready(
        gra_forward(x2, wx, bx, wy, by, tile_m=8, tile_n=128,
                    fused_bytes_limit=0))
    ref2 = _gra_reference(x2, wx, bx, wy, by)
    assert out2.shape == (B2, D2)
    assert jnp.allclose(out2, ref2, atol=1e-5, rtol=1e-5), "mismatch (tiled path)"

    print("KERNEL_OK")
</pallas_src>

<mosaic_0001>
module attributes {stable_mosaic.version = 11 : i64} {
  func.func @_gra_fused_kernel(%arg0: i32, %arg1: memref<1xf32, #tpu.memory_space<smem>>, %arg2: memref<1xf32, #tpu.memory_space<smem>>, %arg3: memref<1xf32, #tpu.memory_space<smem>>, %arg4: memref<1xf32, #tpu.memory_space<smem>>, %arg5: memref<8x32xf32, #tpu.memory_space<vmem>>, %arg6: memref<8x32xf32, #tpu.memory_space<vmem>>) attributes {dimension_semantics = [#tpu.dimension_semantics<arbitrary>], iteration_bounds = array<i64: 1>, scalar_prefetch = 0 : i64, scratch_operands = 0 : i64, tpu.core_type = #tpu.core_type<tc>, window_params = [{transform_indices = @transform_0, window_bounds = array<i64: 1>}, {transform_indices = @transform_1, window_bounds = array<i64: 1>}, {transform_indices = @transform_2, window_bounds = array<i64: 1>}, {transform_indices = @transform_3, window_bounds = array<i64: 1>}, {pipeline_mode = #tpu.pipeline_mode<synchronous>, transform_indices = @transform_4, window_bounds = array<i64: 8, 32>}, {pipeline_mode = #tpu.pipeline_mode<synchronous>, transform_indices = @transform_5, window_bounds = array<i64: 8, 32>}]} {
    %c0 = arith.constant 0 : index
    %c0_0 = arith.constant 0 : index
    %0 = vector.load %arg5[%c0, %c0_0] : memref<8x32xf32, #tpu.memory_space<vmem>>, vector<8x32xf32>
    %cst = arith.constant dense<0.000000e+00> : vector<8xf32>
    %1 = vector.multi_reduction <add>, %0, %cst [1] : vector<8x32xf32> to vector<8xf32>
    %2 = vector.shape_cast %1 : vector<8xf32> to vector<8x1xf32>
    %cst_1 = arith.constant 3.125000e-02 : f32
    %3 = vector.broadcast %cst_1 : f32 to vector<8x1xf32>
    %4 = arith.mulf %2, %3 : vector<8x1xf32>
    %cst_2 = arith.constant dense<0.000000e+00> : vector<32xf32>
    %5 = vector.multi_reduction <add>, %0, %cst_2 [0] : vector<8x32xf32> to vector<32xf32>
    %6 = vector.shape_cast %5 : vector<32xf32> to vector<1x32xf32>
    %cst_3 = arith.constant 1.250000e-01 : f32
    %7 = vector.broadcast %cst_3 : f32 to vector<1x32xf32>
    %8 = arith.mulf %6, %7 : vector<1x32xf32>
    %c0_4 = arith.constant 0 : index
    %9 = memref.load %arg1[%c0_4] : memref<1xf32, #tpu.memory_space<smem>>
    %10 = vector.broadcast %9 : f32 to vector<8x1xf32>
    %11 = arith.mulf %10, %4 : vector<8x1xf32>
    %c0_5 = arith.constant 0 : index
    %12 = memref.load %arg2[%c0_5] : memref<1xf32, #tpu.memory_space<smem>>
    %13 = vector.broadcast %12 : f32 to vector<8x1xf32>
    %14 = arith.addf %11, %13 : vector<8x1xf32>
    %c0_6 = arith.constant 0 : index
    %15 = memref.load %arg3[%c0_6] : memref<1xf32, #tpu.memory_space<smem>>
    %16 = vector.broadcast %15 : f32 to vector<1x32xf32>
    %17 = arith.mulf %16, %8 : vector<1x32xf32>
    %c0_7 = arith.constant 0 : index
    %18 = memref.load %arg4[%c0_7] : memref<1xf32, #tpu.memory_space<smem>>
    %19 = vector.broadcast %18 : f32 to vector<1x32xf32>
    %20 = arith.addf %17, %19 : vector<1x32xf32>
    %cst_8 = arith.constant dense<0.000000e+00> : vector<1xf32>
    %21 = vector.multi_reduction <add>, %14, %cst_8 [0] : vector<8x1xf32> to vector<1xf32>
    %22 = vector.shape_cast %21 : vector<1xf32> to vector<1x1xf32>
    %cst_9 = arith.constant 1.250000e-01 : f32
    %23 = vector.broadcast %cst_9 : f32 to vector<1x1xf32>
    %24 = arith.mulf %22, %23 : vector<1x1xf32>
    %25 = vector.broadcast %24 : vector<1x1xf32> to vector<8x1xf32>
    %26 = arith.subf %14, %25 : vector<8x1xf32>
    %27 = arith.mulf %26, %26 : vector<8x1xf32>
    %cst_10 = arith.constant dense<0.000000e+00> : vector<1xf32>
    %28 = vector.multi_reduction <add>, %27, %cst_10 [0] : vector<8x1xf32> to vector<1xf32>
    %29 = vector.shape_cast %28 : vector<1xf32> to vector<1x1xf32>
    %cst_11 = arith.constant 1.250000e-01 : f32
    %30 = vector.broadcast %cst_11 : f32 to vector<1x1xf32>
    %31 = arith.mulf %29, %30 : vector<1x1xf32>
    %cst_12 = arith.constant 9.99999974E-6 : f32
    %32 = vector.broadcast %cst_12 : f32 to vector<1x1xf32>
    %33 = arith.addf %31, %32 : vector<1x1xf32>
    %34 = math.sqrt %33 : vector<1x1xf32>
    %cst_13 = arith.constant 9.99999974E-6 : f32
    %35 = vector.broadcast %cst_13 : f32 to vector<1x1xf32>
    %36 = arith.addf %34, %35 : vector<1x1xf32>
    %37 = vector.broadcast %36 : vector<1x1xf32> to vector<8x1xf32>
    %38 = arith.divf %26, %37 : vector<8x1xf32>
    %39 = arith.negf %38 : vector<8x1xf32>
    %40 = math.exp %39 : vector<8x1xf32>
    %cst_14 = arith.constant 1.000000e+00 : f32
    %41 = vector.broadcast %cst_14 : f32 to vector<8x1xf32>
    %42 = arith.addf %41, %40 : vector<8x1xf32>
    %43 = arith.divf %41, %42 : vector<8x1xf32>
    %cst_15 = arith.constant dense<0.000000e+00> : vector<1xf32>
    %44 = vector.multi_reduction <add>, %20, %cst_15 [1] : vector<1x32xf32> to vector<1xf32>
    %45 = vector.shape_cast %44 : vector<1xf32> to vector<1x1xf32>
    %cst_16 = arith.constant 3.125000e-02 : f32
    %46 = vector.broadcast %cst_16 : f32 to vector<1x1xf32>
    %47 = arith.mulf %45, %46 : vector<1x1xf32>
    %48 = vector.broadcast %47 : vector<1x1xf32> to vector<1x32xf32>
    %49 = arith.subf %20, %48 : vector<1x32xf32>
    %50 = arith.mulf %49, %49 : vector<1x32xf32>
    %cst_17 = arith.constant dense<0.000000e+00> : vector<1xf32>
    %51 = vector.multi_reduction <add>, %50, %cst_17 [1] : vector<1x32xf32> to vector<1xf32>
    %52 = vector.shape_cast %51 : vector<1xf32> to vector<1x1xf32>
    %cst_18 = arith.constant 3.125000e-02 : f32
    %53 = vector.broadcast %cst_18 : f32 to vector<1x1xf32>
    %54 = arith.mulf %52, %53 : vector<1x1xf32>
    %cst_19 = arith.constant 9.99999974E-6 : f32
    %55 = vector.broadcast %cst_19 : f32 to vector<1x1xf32>
    %56 = arith.addf %54, %55 : vector<1x1xf32>
    %57 = math.sqrt %56 : vector<1x1xf32>
    %cst_20 = arith.constant 9.99999974E-6 : f32
    %58 = vector.broadcast %cst_20 : f32 to vector<1x1xf32>
    %59 = arith.addf %57, %58 : vector<1x1xf32>
    %60 = vector.broadcast %59 : vector<1x1xf32> to vector<1x32xf32>
    %61 = arith.divf %49, %60 : vector<1x32xf32>
    %62 = arith.negf %61 : vector<1x32xf32>
    %63 = math.exp %62 : vector<1x32xf32>
    %cst_21 = arith.constant 1.000000e+00 : f32
    %64 = vector.broadcast %cst_21 : f32 to vector<1x32xf32>
    %65 = arith.addf %64, %63 : vector<1x32xf32>
    %66 = arith.divf %64, %65 : vector<1x32xf32>
    %67 = vector.broadcast %43 : vector<8x1xf32> to vector<8x32xf32>
    %68 = arith.mulf %0, %67 : vector<8x32xf32>
    %69 = vector.broadcast %66 : vector<1x32xf32> to vector<8x32xf32>
    %70 = arith.mulf %68, %69 : vector<8x32xf32>
    %c0_22 = arith.constant 0 : index
    %c0_23 = arith.constant 0 : index
    %71 = vector.load %arg6[%c0_22, %c0_23] : memref<8x32xf32, #tpu.memory_space<vmem>>, vector<8x32xf32>
    tpu.vector_store %arg6[%c0_22, %c0_23], %70 {strides = array<i32>} : memref<8x32xf32, #tpu.memory_space<vmem>>, vector<8x32xf32>,
    return
  }
  func.func @transform_0(%arg0: i32) -> i32 {
    %c0_i32 = arith.constant 0 : i32
    %c0_i32_0 = arith.constant 0 : i32
    return %c0_i32 : i32
  }
  func.func @transform_1(%arg0: i32) -> i32 {
    %c0_i32 = arith.constant 0 : i32
    %c0_i32_0 = arith.constant 0 : i32
    return %c0_i32 : i32
  }
  func.func @transform_2(%arg0: i32) -> i32 {
    %c0_i32 = arith.constant 0 : i32
    %c0_i32_0 = arith.constant 0 : i32
    return %c0_i32 : i32
  }
  func.func @transform_3(%arg0: i32) -> i32 {
    %c0_i32 = arith.constant 0 : i32
    %c0_i32_0 = arith.constant 0 : i32
    return %c0_i32 : i32
  }
  func.func @transform_4(%arg0: i32) -> (i32, i32) {
    %c0_i32 = arith.constant 0 : i32
    %c0_i32_0 = arith.constant 0 : i32
    %c0_i32_1 = arith.constant 0 : i32
    return %c0_i32, %c0_i32_0 : i32, i32
  }
  func.func @transform_5(%arg0: i32) -> (i32, i32) {
    %c0_i32 = arith.constant 0 : i32
    %c0_i32_0 = arith.constant 0 : i32
    %c0_i32_1 = arith.constant 0 : i32
    return %c0_i32, %c0_i32_0 : i32, i32
  }
}

</mosaic_0001>

<llo_original>
// kernel: tpu_custom_call.1
$region0: #{tpu_custom_call.1}
  #allocation0 [shape = 'u32[]', space=smem, size = 0x4, offset = 0x4, fixed_abs, tag = 'smem constant byte address 0x4 - core index']
  #allocation1 [shape = 'u32[144,128]{1,0:T(1,128)}', space=vmem, size = 0x12000, scoped, tag = 'internal scratch']
  #allocation2 [shape = 'f32[1]{0:T(128)S(6)}', space=smem, size = 0x200, scoped, tag = 'scoped memory for tpu_custom_call.1']
  #allocation3 [shape = 'f32[1]{0:T(128)S(6)}', space=smem, size = 0x200, scoped, tag = 'scoped memory for tpu_custom_call.1']
  #allocation4 [shape = 'f32[1]{0:T(128)S(6)}', space=smem, size = 0x200, scoped, tag = 'scoped memory for tpu_custom_call.1']
  #allocation5 [shape = 'f32[1]{0:T(128)S(6)}', space=smem, size = 0x200, scoped, tag = 'scoped memory for tpu_custom_call.1']
  %s0 = inlined_call_operand.<no memory space> [shape: f32[1], index: 0, kind: input, shape index: {}]
  %s1 = inlined_call_operand.<no memory space> [shape: f32[1], index: 1, kind: input, shape index: {}]
  %s2 = inlined_call_operand.<no memory space> [shape: f32[1], index: 2, kind: input, shape index: {}]
  %s3 = inlined_call_operand.<no memory space> [shape: f32[1], index: 3, kind: input, shape index: {}]
  %s4 = inlined_call_operand.vmem [shape: f32[8,32], index: 4, kind: input, shape index: {}]
  %s5 = inlined_call_operand.hbm [shape: f32[8,32], index: 5, kind: output, shape index: {}]
  %s6 = sld [smem:[#allocation0]]
  $region30: #{tpu_custom_call.1} parent=0
    _
  %s8 = ssub.s32 1, %s6
  %s9 = scalar_select 0, %s8, %s6
  %10 = sst [smem:[#allocation2]] %s0
  %11 = sst [smem:[#allocation3]] %s1
  %12 = sst [smem:[#allocation4]] %s2
  %13 = sst [smem:[#allocation5]] %s3
  $region1: #{tpu_custom_call.1} parent=0
    #allocation6 [shape = 'u8[4096]{0}', space=vmem, size = 0x1000, scoped, tag = 'output window, operand 0, single buffered']
    #allocation7 [shape = 's32[1]{0}', space=sflag, size = 0x4, scoped, tag = 'scoped memory for tpu_custom_call.1']
    %14 = vsyncpa [#allocation7], 0
    // Predicated region
    $region2: #{tpu_custom_call.1} parent=1 // pred_check
      _
    $region3: #{tpu_custom_call.1} parent=1 // pred_check_branch
      %16 = sbr.rel (0) target = $region5
    $region4: #{tpu_custom_call.1} parent=1 // pred_region
      _
    $region5: #{tpu_custom_call.1} parent=1 // pred_fallthru
      _
    // Predicated region
    $region6: #{tpu_custom_call.1} parent=1 // pred_check
      _
    $region7: #{tpu_custom_call.1} parent=1 // pred_check_branch
      %18 = sbr.rel (0) target = $region9
    $region8: #{tpu_custom_call.1} parent=1 // pred_region
      _
    $region9: #{tpu_custom_call.1} parent=1 // pred_fallthru
      _
    // Predicated region
    $region10: #{tpu_custom_call.1} parent=1 // pred_check
      _
    $region11: #{tpu_custom_call.1} parent=1 // pred_check_branch
      %20 = sbr.rel (0) target = $region13
    $region12: #{tpu_custom_call.1} parent=1 // pred_region
      _
    $region13: #{tpu_custom_call.1} parent=1 // pred_fallthru
      _
    // Predicated region
    $region14: #{tpu_custom_call.1} parent=1 // pred_check
      _
    $region15: #{tpu_custom_call.1} parent=1 // pred_check_branch
      %22 = sbr.rel (0) target = $region17
    $region16: #{tpu_custom_call.1} parent=1 // pred_region
      _
    $region17: #{tpu_custom_call.1} parent=1 // pred_fallthru
      _
    // Predicated region
    $region18: #{tpu_custom_call.1} parent=1 // pred_check
      _
    $region19: #{tpu_custom_call.1} parent=1 // pred_check_branch
      %24 = sbr.rel (0) target = $region21
    $region20: #{tpu_custom_call.1} parent=1 // pred_region
      _
    $region21: #{tpu_custom_call.1} parent=1 // pred_fallthru
      _
    %v25 = vld [vmem:[%s4] sm:$0xff]
    %vm26 = vcmask 261120
    %v27 = vsel %vm26, %v25, 0.0
    %28 = vadd.xlane.f32.xlu0 %v27
    %v29 = vpop.xlane.xlu0 %28
    %v30 = vmul.f32 %v29, 0.03125
    %v31 = vrot.slane %v27, 4
    %v32 = vadd.f32 %v27, %v31
    %v33 = vrot.slane %v32, 2
    %v34 = vadd.f32 %v32, %v33
    %v35 = vrot.slane %v34, 1
    %v36 = vadd.f32 %v34, %v35
    %v37 = vmul.f32 %v36, 0.125
    %s38 = sld [smem:[#allocation2]]
    %v39 = vstv %s38
    %v40 = vmul.f32 %v39, %v30
    %s41 = sld [smem:[#allocation3]]
    %v42 = vstv %s41
    %v43 = vadd.f32 %v40, %v42
    %s44 = sld [smem:[#allocation4]]
    %v45 = vstv %s44
    %v46 = vmul.f32 %v45, %v37
    %s47 = sld [smem:[#allocation5]]
    %v48 = vstv %s47
    %v49 = vadd.f32 %v46, %v48
    %v50 = vrot.slane %v43, 4
    %v51 = vadd.f32 %v43, %v50
    %v52 = vrot.slane %v51, 2
    %v53 = vadd.f32 %v51, %v52
    %v54 = vrot.slane %v53, 1
    %v55 = vadd.f32 %v53, %v54
    %v56 = vmul.f32 %v55, 0.125
    %v57 = vsub.f32 %v43, %v56
    %v58 = vmul.f32 %v57, %v57
    %v59 = vrot.slane %v58, 4
    %v60 = vadd.f32 %v58, %v59
    %v61 = vrot.slane %v60, 2
    %v62 = vadd.f32 %v60, %v61
    %v63 = vrot.slane %v62, 1
    %v64 = vadd.f32 %v62, %v63
    %v65 = vmul.f32 %v64, 0.125
    %v66 = vadd.f32 %v65, 1e-05
    %v67 = vrsqrt.pop %v66
    %v68 = vmul.f32 %v66, %v67
    %vm69 = vcmp.eq.f32.partialorder %v66, inf
    %v70 = vsel %vm69, %v66, %v68
    %vm71 = vcmp.eq.f32.partialorder %v66, 0.0
    %v72 = vand.u32 %v66, 2147483648
    %v73 = vsel %vm71, %v72, %v70
    %v74 = vadd.f32 %v73, 1e-05
    %v75 = vrcp.pop %v74
    %v76 = vmul.f32 %v57, %v75
    %v77 = vxor.u32 %v76, 2147483648
    %v78 = vmul.f32 %v77, 1.442695
    %v79 = vpow.pop %v78
    %v80 = vadd.f32 %v79, 1.0
    %v81 = vrcp.pop %v80
    %v82 = vmul.f32 1.0, %v81
    %v83 = vsel %vm26, %v49, 0.0
    %84 = vadd.xlane.f32.xlu0 %v83
    %v85 = vpop.xlane.xlu0 %84
    %v86 = vmul.f32 %v85, 0.03125
    %v87 = vsub.f32 %v49, %v86
    %v88 = vmul.f32 %v87, %v87
    %v89 = vsel %vm26, %v88, 0.0
    %90 = vadd.xlane.f32.xlu0 %v89
    %v91 = vpop.xlane.xlu0 %90
    %v92 = vmul.f32 %v91, 0.03125
    %v93 = vadd.f32 %v92, 1e-05
    %v94 = vrsqrt.pop %v93
    %v95 = vmul.f32 %v93, %v94
    %vm96 = vcmp.eq.f32.partialorder %v93, inf
    %v97 = vsel %vm96, %v93, %v95
    %vm98 = vcmp.eq.f32.partialorder %v93, 0.0
    %v99 = vand.u32 %v93, 2147483648
    %v100 = vsel %vm98, %v99, %v97
    %v101 = vadd.f32 %v100, 1e-05
    %v102 = vrcp.pop %v101
    %v103 = vmul.f32 %v87, %v102
    %v104 = vxor.u32 %v103, 2147483648
    %v105 = vmul.f32 %v104, 1.442695
    %v106 = vpow.pop %v105
    %v107 = vadd.f32 %v106, 1.0
    %v108 = vrcp.pop %v107
    %v109 = vmul.f32 1.0, %v108
    %v110 = vmul.f32 %v25, %v82
    %v111 = vmul.f32 %v110, %v109
    %112 = vst.msk [vmem:[#allocation6] sm:$0xff] %vm26, %v111
    // Predicated region
    $region22: #{tpu_custom_call.1} parent=1 // pred_check
      _
    $region23: #{tpu_custom_call.1} parent=1 // pred_check_branch
      %114 = sbr.rel (0) target = $region25
    $region24: #{tpu_custom_call.1} parent=1 // pred_region
      %s116 = ssub.s32 128, 128
      %117 = vsyncadd [#allocation7], %s116
      %s119 = sshll.u32 [#allocation6], 4
      %s120 = int_to_ptr.vmem [resolvable:$true] %s119
      %122 = dma.vmem_to_hbm [thread:$0]  %s120, 128, %s5, [#allocation7]
    $region25: #{tpu_custom_call.1} parent=1 // pred_fallthru
      _
    // Predicated region
    $region26: #{tpu_custom_call.1} parent=1 // pred_check
      _
    $region27: #{tpu_custom_call.1} parent=1 // pred_check_branch
      %124 = sbr.rel (0) target = $region29
    $region28: #{tpu_custom_call.1} parent=1 // pred_region
      %125 = dma.done [#allocation7], 128
    $region29: #{tpu_custom_call.1} parent=1 // pred_fallthru
      _
    %126 = vsyncpa [#allocation7], 1

</llo_original>
